<compile_context>
chip_gen: v7x
topology: tpu7x:2x2x1
jax: 0.10.0
libtpu: 0.0.40
codegen_flags: <defaults>
</compile_context>

<pallas_src>
import random

import numpy as np
import jax
import jax.numpy as jnp
from jax.experimental import pallas as pl
from jax.experimental.pallas import tpu as pltpu


# -----------------------------------------------------------------------------
# Kernel (single invocation, no grid)
# -----------------------------------------------------------------------------
def _hgnn_kernel(x_ref, we_ref, be_ref, pe_ref, o_ref):
    """Lane index l = o*T*W + t*W + w  (L = C_out*T*W = 128 for the ref shapes).

    x_ref : (B, C_in, Mp, L)  expanded activations   x_exp[b,c,m,l] = x[b,c,t(l),m]
    we_ref: (C_in, L)         expanded conv weights  we[c,l]        = W[o(l),c]
    be_ref: (1, L)            expanded conv bias     be[0,l]        = bias[o(l)]
    pe_ref: (BP, Mp, L)       expanded adjacency     pe[bp,m,l]     = P[bp,t(l),m,w(l)]
                              (BP == 1 when P is shared across the batch)
    o_ref : (B, L)            lane-dense output slab
    Mp is the person axis zero-padded to a multiple of 8 (full sublane tiles);
    padded rows of x and pe are zero, so they contribute nothing to the sum.
    """
    B, C_in, Mp, L = x_ref.shape
    BP = pe_ref.shape[0]

    # ---- loop-invariant hoists (JAX does not CSE broadcast_in_dim) ----------
    we = we_ref[...]                                              # (C_in, L)
    we_rows = [jnp.broadcast_to(we[c:c + 1, :], (Mp, L)) for c in range(C_in)]
    be_full = jnp.broadcast_to(be_ref[...], (Mp, L))              # (Mp, L)
    pe_shared = pe_ref[0] if BP == 1 else None                    # loaded once

    rows = []
    for b in range(B):                                            # static unroll, B tiny
        # 1x1 conv == unrolled VPU multiply-add over C_in (no MXU at C=4).
        acc = we_rows[0] * x_ref[b, 0]                            # (Mp, L)
        for c in range(1, C_in):
            acc = acc + we_rows[c] * x_ref[b, c]
        ye = acc + be_full                                        # bias before contraction

        # person-graph contraction: elementwise product + sublane reduce over Mp.
        pe = pe_shared if BP == 1 else pe_ref[b]                  # (Mp, L)
        rows.append(jnp.sum(ye * pe, axis=0, keepdims=True))      # (1, L)

    # Fused ReLU, ONE full-width (B, L) store.
    o_ref[...] = jnp.maximum(jnp.concatenate(rows, axis=0), 0.0).astype(o_ref.dtype)


# -----------------------------------------------------------------------------
# One-time parameter prep (depends only on conv_w / conv_b)
# -----------------------------------------------------------------------------
def prep_conv_params(conv_w, conv_b, T, W):
    """Lane-expanded conv weight / bias rows; build once, reuse every forward.

    conv_w : (C_out, C_in)   Conv2d(kernel_size=1) weight, squeezed
    conv_b : (C_out,)
    returns we (C_in, L), be (1, L) with L = C_out*T*W and
            we[c, o*T*W + k] = conv_w[o, c],  be[0, o*T*W + k] = conv_b[o].
    """
    C_out, C_in = conv_w.shape
    L = C_out * T * W
    we = jnp.broadcast_to(conv_w.T[:, :, None], (C_in, C_out, T * W)).reshape(C_in, L)
    be = jnp.broadcast_to(conv_b[:, None], (C_out, T * W)).reshape(1, L)
    return we, be


# -----------------------------------------------------------------------------
# Whole forward under a single jit: layout ops fuse into the pallas_call inputs
# -----------------------------------------------------------------------------
@jax.jit
def _hgnn_forward_jit(we, be, x, P, remain_people, drop_mask):
    B, C_in, T, _ = x.shape
    W = P.shape[-1]
    L = we.shape[1]
    C_out = L // (T * W)
    Lp = remain_people.shape[1]

    # ---- 1. filter_by_index_v2 + person-drop mask ---------------------------
    if Lp != 12:
        # gather path: filtered[b, t, l, n] = P[t, remain_people[b, l], n]
        idx = remain_people.astype(jnp.int32)                     # (B, Lp)
        Pb = jnp.transpose(P[:, idx, :], (1, 0, 2, 3))            # (B, T, Lp, W)
        Pb = Pb * drop_mask[None, None, :, None]                  # zero FILTERED positions
        P_out = Pb
        P4 = Pb                                                   # (BP=B, T, Lp, W)
    else:
        P_shared = P * drop_mask[None, :, None]                   # (T, M, W), masked once
        P_out = jnp.broadcast_to(P_shared[None], (B,) + P.shape)  # returned P only
        P4 = P_shared[None]                                       # (BP=1, T, M, W)

    BP, _, Mper, _ = P4.shape
    assert x.shape[3] == Mper, "x person axis must match (filtered) P person axis"
    Mp = ((Mper + 7) // 8) * 8                                    # pad persons to full sublane tiles

    # ---- 2. lane-dense layout plumbing (fuses into the pallas input DMA) ----
    # x_exp[b, c, m, o*T*W + t*W + w] = x[b, c, t, m]
    xt = jnp.transpose(x, (0, 1, 3, 2))                           # (B, C_in, Mper, T)
    xt = jnp.pad(xt, ((0, 0), (0, 0), (0, Mp - Mper), (0, 0)))
    x_exp = jnp.broadcast_to(
        xt[:, :, :, None, :, None], (B, C_in, Mp, C_out, T, W)
    ).reshape(B, C_in, Mp, L)

    # pe[bp, m, o*T*W + t*W + w] = P4[bp, t, m, w]
    pt = jnp.transpose(P4, (0, 2, 1, 3))                          # (BP, Mper, T, W)
    pt = jnp.pad(pt, ((0, 0), (0, Mp - Mper), (0, 0), (0, 0)))
    pe = jnp.broadcast_to(
        pt[:, :, None, :, :], (BP, Mp, C_out, T, W)
    ).reshape(BP, Mp, L)

    # ---- 3. single no-grid pallas_call, all (tiny) operands VMEM-resident ----
    out_flat = pl.pallas_call(
        _hgnn_kernel,
        out_shape=jax.ShapeDtypeStruct((B, L), x.dtype),
        in_specs=[pl.BlockSpec(memory_space=pltpu.MemorySpace.VMEM)] * 4,
        out_specs=pl.BlockSpec(memory_space=pltpu.MemorySpace.VMEM),
    )(x_exp, we, be, pe)

    return out_flat.reshape(B, C_out, T, W), P_out


def hgnn_forward(we, be, x, P, remain_people, drop_indices):
    """Full hgnn.forward.

    `drop_indices` come from the module's host-side `random` draw; they are
    folded into a 0/1 person mask on the host so the jitted path multiplies
    instead of scattering.  In the shared (L == 12) path the indices refer to
    original person IDs; in the gather path they refer to positions in the
    filtered person list — exactly as `P[:, :, indices, :] = 0` does after
    filter_by_index_v2 in the PyTorch module.
    """
    Lp = remain_people.shape[1]
    n_person = P.shape[1] if Lp == 12 else Lp
    mask = np.ones((n_person,), dtype=np.float32)
    if len(drop_indices) > 0:
        mask[np.asarray(drop_indices, dtype=np.int64)] = 0.0
    return _hgnn_forward_jit(we, be, x, P, remain_people,
                             jnp.asarray(mask, dtype=P.dtype))


# -----------------------------------------------------------------------------
# Pure-JAX reference for the numerical check
# -----------------------------------------------------------------------------
def _reference(conv_w, conv_b, x, Pb):
    y = jnp.einsum('oc,bctm->botm', conv_w, x) + conv_b[None, :, None, None]
    z = jnp.einsum('bctm,btmw->bctw', y, Pb)
    return jnp.maximum(z, 0.0)


if __name__ == "__main__":
    B, C, T, M, Wg = 2, 4, 8, 12, 4   # out_channels=4, 12 persons, 4 groups, 8 frames

    key = jax.random.PRNGKey(0)
    k1, k2, k3, k4, k5, k6 = jax.random.split(key, 6)
    x = jax.random.normal(k1, (B, C, T, M), jnp.float32)
    P = jax.random.uniform(k2, (T, M, Wg), jnp.float32)
    remain_people = jnp.tile(jnp.arange(M, dtype=jnp.int32)[None], (B, 1))   # L == 12 path

    # ConvPersonGraphical params: Conv2d(C, C, kernel_size=1) -> weight (C, C, 1, 1), bias (C,)
    conv_w = 0.1 * jax.random.normal(k3, (C, C), jnp.float32)
    conv_b = 0.1 * jax.random.normal(k4, (C,), jnp.float32)
    # nodevec1 / nodevec2 exist in __init__ but are not used in forward (parity only).
    nodevec1 = jax.random.normal(k5, (2, 12, 10), jnp.float32)   # unused
    nodevec2 = jax.random.normal(k6, (2, 10, 4), jnp.float32)    # unused

    # One-time parameter prep (lane-expanded conv weight / bias).
    we, be = prep_conv_params(conv_w, conv_b, T, Wg)

    # Deterministic stand-in for the module's host-side `random` usage.
    random.seed(0)
    length = random.randint(0, 4)
    dist = [0.1] * 2 + [0.05] * 2 + [0.1] * 2
    drop_indices = random.choices(range(6), weights=dist, k=length)

    out, P_out = hgnn_forward(we, be, x, P, remain_people, drop_indices)
    out, P_out = jax.block_until_ready((out, P_out))

    ref = _reference(conv_w, conv_b, x, P_out)
    assert out.shape == (B, C, T, Wg) and P_out.shape == (B, T, M, Wg)
    assert jnp.allclose(out, ref, rtol=1e-4, atol=1e-4)

    # TODO(synk): gumbel_softmax is defined on the module but never called in forward; not implemented.
    print("KERNEL_OK")
</pallas_src>

<mosaic_0001>
module attributes {stable_mosaic.version = 11 : i64} {
  func.func @_hgnn_kernel(%arg0: memref<2x4x16x128xf32, #tpu.memory_space<vmem>>, %arg1: memref<4x128xf32, #tpu.memory_space<vmem>>, %arg2: memref<1x128xf32, #tpu.memory_space<vmem>>, %arg3: memref<1x16x128xf32, #tpu.memory_space<vmem>>, %arg4: memref<2x128xf32, #tpu.memory_space<vmem>>) attributes {dimension_semantics = [], scalar_prefetch = 0 : i64, scratch_operands = 0 : i64, tpu.core_type = #tpu.core_type<tc>} {
    %c0 = arith.constant 0 : index
    %c0_0 = arith.constant 0 : index
    %0 = vector.load %arg1[%c0, %c0_0] : memref<4x128xf32, #tpu.memory_space<vmem>>, vector<4x128xf32>
    %1 = vector.extract_strided_slice %0 {offsets = [0, 0], sizes = [1, 128], strides = [1, 1]} : vector<4x128xf32> to vector<1x128xf32>
    %2 = vector.shape_cast %1 : vector<1x128xf32> to vector<1x128xf32>
    %3 = vector.broadcast %2 : vector<1x128xf32> to vector<16x128xf32>
    %4 = vector.extract_strided_slice %0 {offsets = [1, 0], sizes = [1, 128], strides = [1, 1]} : vector<4x128xf32> to vector<1x128xf32>
    %5 = vector.shape_cast %4 : vector<1x128xf32> to vector<1x128xf32>
    %6 = vector.broadcast %5 : vector<1x128xf32> to vector<16x128xf32>
    %7 = vector.extract_strided_slice %0 {offsets = [2, 0], sizes = [1, 128], strides = [1, 1]} : vector<4x128xf32> to vector<1x128xf32>
    %8 = vector.shape_cast %7 : vector<1x128xf32> to vector<1x128xf32>
    %9 = vector.broadcast %8 : vector<1x128xf32> to vector<16x128xf32>
    %10 = vector.extract_strided_slice %0 {offsets = [3, 0], sizes = [1, 128], strides = [1, 1]} : vector<4x128xf32> to vector<1x128xf32>
    %11 = vector.shape_cast %10 : vector<1x128xf32> to vector<1x128xf32>
    %12 = vector.broadcast %11 : vector<1x128xf32> to vector<16x128xf32>
    %c0_1 = arith.constant 0 : index
    %c0_2 = arith.constant 0 : index
    %13 = vector.load %arg2[%c0_1, %c0_2] : memref<1x128xf32, #tpu.memory_space<vmem>>, vector<1x128xf32>
    %14 = vector.shape_cast %13 : vector<1x128xf32> to vector<1x128xf32>
    %15 = vector.broadcast %14 : vector<1x128xf32> to vector<16x128xf32>
    %c0_3 = arith.constant 0 : index
    %c0_4 = arith.constant 0 : index
    %c0_5 = arith.constant 0 : index
    %16 = vector.load %arg3[%c0_3, %c0_4, %c0_5] : memref<1x16x128xf32, #tpu.memory_space<vmem>>, vector<1x16x128xf32>
    %17 = vector.shape_cast %16 : vector<1x16x128xf32> to vector<16x128xf32>
    %c0_6 = arith.constant 0 : index
    %c0_7 = arith.constant 0 : index
    %c0_8 = arith.constant 0 : index
    %c0_9 = arith.constant 0 : index
    %18 = vector.load %arg0[%c0_6, %c0_7, %c0_8, %c0_9] : memref<2x4x16x128xf32, #tpu.memory_space<vmem>>, vector<1x1x16x128xf32>
    %19 = vector.shape_cast %18 : vector<1x1x16x128xf32> to vector<16x128xf32>
    %20 = arith.mulf %3, %19 : vector<16x128xf32>
    %c0_10 = arith.constant 0 : index
    %c1 = arith.constant 1 : index
    %c0_11 = arith.constant 0 : index
    %c0_12 = arith.constant 0 : index
    %21 = vector.load %arg0[%c0_10, %c1, %c0_11, %c0_12] : memref<2x4x16x128xf32, #tpu.memory_space<vmem>>, vector<1x1x16x128xf32>
    %22 = vector.shape_cast %21 : vector<1x1x16x128xf32> to vector<16x128xf32>
    %23 = arith.mulf %6, %22 : vector<16x128xf32>
    %24 = arith.addf %20, %23 : vector<16x128xf32>
    %c0_13 = arith.constant 0 : index
    %c2 = arith.constant 2 : index
    %c0_14 = arith.constant 0 : index
    %c0_15 = arith.constant 0 : index
    %25 = vector.load %arg0[%c0_13, %c2, %c0_14, %c0_15] : memref<2x4x16x128xf32, #tpu.memory_space<vmem>>, vector<1x1x16x128xf32>
    %26 = vector.shape_cast %25 : vector<1x1x16x128xf32> to vector<16x128xf32>
    %27 = arith.mulf %9, %26 : vector<16x128xf32>
    %28 = arith.addf %24, %27 : vector<16x128xf32>
    %c0_16 = arith.constant 0 : index
    %c3 = arith.constant 3 : index
    %c0_17 = arith.constant 0 : index
    %c0_18 = arith.constant 0 : index
    %29 = vector.load %arg0[%c0_16, %c3, %c0_17, %c0_18] : memref<2x4x16x128xf32, #tpu.memory_space<vmem>>, vector<1x1x16x128xf32>
    %30 = vector.shape_cast %29 : vector<1x1x16x128xf32> to vector<16x128xf32>
    %31 = arith.mulf %12, %30 : vector<16x128xf32>
    %32 = arith.addf %28, %31 : vector<16x128xf32>
    %33 = arith.addf %32, %15 : vector<16x128xf32>
    %34 = arith.mulf %33, %17 : vector<16x128xf32>
    %cst = arith.constant dense<0.000000e+00> : vector<128xf32>
    %35 = vector.multi_reduction <add>, %34, %cst [0] : vector<16x128xf32> to vector<128xf32>
    %36 = vector.shape_cast %35 : vector<128xf32> to vector<1x128xf32>
    %c1_19 = arith.constant 1 : index
    %c0_20 = arith.constant 0 : index
    %c0_21 = arith.constant 0 : index
    %c0_22 = arith.constant 0 : index
    %37 = vector.load %arg0[%c1_19, %c0_20, %c0_21, %c0_22] : memref<2x4x16x128xf32, #tpu.memory_space<vmem>>, vector<1x1x16x128xf32>
    %38 = vector.shape_cast %37 : vector<1x1x16x128xf32> to vector<16x128xf32>
    %39 = arith.mulf %3, %38 : vector<16x128xf32>
    %c1_23 = arith.constant 1 : index
    %c1_24 = arith.constant 1 : index
    %c0_25 = arith.constant 0 : index
    %c0_26 = arith.constant 0 : index
    %40 = vector.load %arg0[%c1_23, %c1_24, %c0_25, %c0_26] : memref<2x4x16x128xf32, #tpu.memory_space<vmem>>, vector<1x1x16x128xf32>
    %41 = vector.shape_cast %40 : vector<1x1x16x128xf32> to vector<16x128xf32>
    %42 = arith.mulf %6, %41 : vector<16x128xf32>
    %43 = arith.addf %39, %42 : vector<16x128xf32>
    %c1_27 = arith.constant 1 : index
    %c2_28 = arith.constant 2 : index
    %c0_29 = arith.constant 0 : index
    %c0_30 = arith.constant 0 : index
    %44 = vector.load %arg0[%c1_27, %c2_28, %c0_29, %c0_30] : memref<2x4x16x128xf32, #tpu.memory_space<vmem>>, vector<1x1x16x128xf32>
    %45 = vector.shape_cast %44 : vector<1x1x16x128xf32> to vector<16x128xf32>
    %46 = arith.mulf %9, %45 : vector<16x128xf32>
    %47 = arith.addf %43, %46 : vector<16x128xf32>
    %c1_31 = arith.constant 1 : index
    %c3_32 = arith.constant 3 : index
    %c0_33 = arith.constant 0 : index
    %c0_34 = arith.constant 0 : index
    %48 = vector.load %arg0[%c1_31, %c3_32, %c0_33, %c0_34] : memref<2x4x16x128xf32, #tpu.memory_space<vmem>>, vector<1x1x16x128xf32>
    %49 = vector.shape_cast %48 : vector<1x1x16x128xf32> to vector<16x128xf32>
    %50 = arith.mulf %12, %49 : vector<16x128xf32>
    %51 = arith.addf %47, %50 : vector<16x128xf32>
    %52 = arith.addf %51, %15 : vector<16x128xf32>
    %53 = arith.mulf %52, %17 : vector<16x128xf32>
    %cst_35 = arith.constant dense<0.000000e+00> : vector<128xf32>
    %54 = vector.multi_reduction <add>, %53, %cst_35 [0] : vector<16x128xf32> to vector<128xf32>
    %55 = vector.shape_cast %54 : vector<128xf32> to vector<1x128xf32>
    %56 = tpu.concatenate %36, %55 in 0 : vector<1x128xf32>, vector<1x128xf32> -> vector<2x128xf32>
    %cst_36 = arith.constant 0.000000e+00 : f32
    %57 = vector.broadcast %cst_36 : f32 to vector<2x128xf32>
    %58 = arith.maximumf %56, %57 : vector<2x128xf32>
    %c0_37 = arith.constant 0 : index
    %c0_38 = arith.constant 0 : index
    %59 = vector.load %arg4[%c0_37, %c0_38] : memref<2x128xf32, #tpu.memory_space<vmem>>, vector<2x128xf32>
    tpu.vector_store %arg4[%c0_37, %c0_38], %58 {strides = array<i32>} : memref<2x128xf32, #tpu.memory_space<vmem>>, vector<2x128xf32>,
    return
  }
}

</mosaic_0001>

<llo_original>
// kernel: _hgnn_forward_jit.1
$region0: #{_hgnn_forward_jit.1}
  #allocation0 [shape = 'u32[]', space=smem, size = 0x4, offset = 0x4, fixed_abs, tag = 'smem constant byte address 0x4 - core index']
  #allocation1 [shape = 'u32[144,128]{1,0:T(1,128)}', space=vmem, size = 0x12000, scoped, tag = 'internal scratch']
  %s0 = inlined_call_operand.vmem [shape: f32[2,4,16,128], index: 0, kind: input, shape index: {}]
  %s1 = inlined_call_operand.vmem [shape: f32[4,128], index: 1, kind: input, shape index: {}]
  %s2 = inlined_call_operand.vmem [shape: f32[1,128], index: 2, kind: input, shape index: {}]
  %s3 = inlined_call_operand.vmem [shape: f32[1,16,128], index: 3, kind: input, shape index: {}]
  %s4 = inlined_call_operand.vmem [shape: f32[2,128], index: 4, kind: output, shape index: {}]
  %s5 = sld [smem:[#allocation0]]
  $region26: #{_hgnn_forward_jit.1} parent=0
    _
  %s7 = ssub.s32 1, %s5
  %s8 = scalar_select 0, %s7, %s5
  // Predicated region
  $region2: #{_hgnn_forward_jit.1} parent=0 // pred_check
    _
  $region3: #{_hgnn_forward_jit.1} parent=0 // pred_check_branch
    %10 = sbr.rel (0) target = $region5
  $region4: #{_hgnn_forward_jit.1} parent=0 // pred_region
    _
  $region5: #{_hgnn_forward_jit.1} parent=0 // pred_fallthru
    _
  // Predicated region
  $region6: #{_hgnn_forward_jit.1} parent=0 // pred_check
    _
  $region7: #{_hgnn_forward_jit.1} parent=0 // pred_check_branch
    %12 = sbr.rel (0) target = $region9
  $region8: #{_hgnn_forward_jit.1} parent=0 // pred_region
    _
  $region9: #{_hgnn_forward_jit.1} parent=0 // pred_fallthru
    _
  // Predicated region
  $region10: #{_hgnn_forward_jit.1} parent=0 // pred_check
    _
  $region11: #{_hgnn_forward_jit.1} parent=0 // pred_check_branch
    %14 = sbr.rel (0) target = $region13
  $region12: #{_hgnn_forward_jit.1} parent=0 // pred_region
    _
  $region13: #{_hgnn_forward_jit.1} parent=0 // pred_fallthru
    _
  // Predicated region
  $region14: #{_hgnn_forward_jit.1} parent=0 // pred_check
    _
  $region15: #{_hgnn_forward_jit.1} parent=0 // pred_check_branch
    %16 = sbr.rel (0) target = $region17
  $region16: #{_hgnn_forward_jit.1} parent=0 // pred_region
    _
  $region17: #{_hgnn_forward_jit.1} parent=0 // pred_fallthru
    _
  %v17 = vld [vmem:[%s1] sm:$0xf]
  %v18 = vlaneseq
  %v19 = vshrl.u32 %v18, 7
  %v20 = vsub.s32 0, %v19
  %v21 = vrot.slane %v17, %v20
  %v22 = vlaneseq
  %v23 = vshrl.u32 %v22, 7
  %v24 = vsub.s32 1, %v23
  %v25 = vrot.slane %v17, %v24
  %v26 = vlaneseq
  %v27 = vshrl.u32 %v26, 7
  %v28 = vsub.s32 2, %v27
  %v29 = vrot.slane %v17, %v28
  %v30 = vlaneseq
  %v31 = vshrl.u32 %v30, 7
  %v32 = vsub.s32 3, %v31
  %v33 = vrot.slane %v17, %v32
  %v34 = vld [vmem:[%s2] sm:$0x1]
  %v36 = vlaneseq
  %v37 = vshrl.u32 %v36, 7
  %v38 = vsub.s32 0, %v37
  %v39 = vrot.slane %v34, %v38
  %v41 = vld [vmem:[%s3] sm:$0xff]
  %v42 = vld [vmem:[%s3 + $0x8] sm:$0xff]
  %v43 = vld [vmem:[%s0] sm:$0xff]
  %v44 = vld [vmem:[%s0 + $0x8] sm:$0xff]
  %v45 = vmul.f32 %v21, %v43
  %v46 = vmul.f32 %v21, %v44
  %s47 = scalar_lea.vmem %s0, 16
  %v48 = vld [vmem:[%s47] sm:$0xff]
  %v49 = vld [vmem:[%s47 + $0x8] sm:$0xff]
  %v50 = vmul.f32 %v25, %v48
  %v51 = vmul.f32 %v25, %v49
  %v52 = vadd.f32 %v45, %v50
  %v53 = vadd.f32 %v46, %v51
  %s54 = scalar_lea.vmem %s0, 32
  %v55 = vld [vmem:[%s54] sm:$0xff]
  %v56 = vld [vmem:[%s54 + $0x8] sm:$0xff]
  %v57 = vmul.f32 %v29, %v55
  %v58 = vmul.f32 %v29, %v56
  %v59 = vadd.f32 %v52, %v57
  %v60 = vadd.f32 %v53, %v58
  %s61 = scalar_lea.vmem %s0, 48
  %v62 = vld [vmem:[%s61] sm:$0xff]
  %v63 = vld [vmem:[%s61 + $0x8] sm:$0xff]
  %v64 = vmul.f32 %v33, %v62
  %v65 = vmul.f32 %v33, %v63
  %v66 = vadd.f32 %v59, %v64
  %v67 = vadd.f32 %v60, %v65
  %v68 = vadd.f32 %v66, %v39
  %v69 = vadd.f32 %v67, %v39
  %v70 = vmul.f32 %v68, %v41
  %v71 = vmul.f32 %v69, %v42
  %v72 = vadd.f32 %v70, %v71
  %v73 = vrot.slane %v72, 4
  %v74 = vadd.f32 %v72, %v73
  %v75 = vrot.slane %v74, 2
  %v76 = vadd.f32 %v74, %v75
  %v77 = vrot.slane %v76, 1
  %v78 = vadd.f32 %v76, %v77
  %s79 = scalar_lea.vmem %s0, 64
  %v80 = vld [vmem:[%s79] sm:$0xff]
  %v81 = vld [vmem:[%s79 + $0x8] sm:$0xff]
  %v82 = vmul.f32 %v21, %v80
  %v83 = vmul.f32 %v21, %v81
  %s84 = scalar_lea.vmem %s0, 80
  %v85 = vld [vmem:[%s84] sm:$0xff]
  %v86 = vld [vmem:[%s84 + $0x8] sm:$0xff]
  %v87 = vmul.f32 %v25, %v85
  %v88 = vmul.f32 %v25, %v86
  %v89 = vadd.f32 %v82, %v87
  %v90 = vadd.f32 %v83, %v88
  %s91 = scalar_lea.vmem %s0, 96
  %v92 = vld [vmem:[%s91] sm:$0xff]
  %v93 = vld [vmem:[%s91 + $0x8] sm:$0xff]
  %v94 = vmul.f32 %v29, %v92
  %v95 = vmul.f32 %v29, %v93
  %v96 = vadd.f32 %v89, %v94
  %v97 = vadd.f32 %v90, %v95
  %s98 = scalar_lea.vmem %s0, 112
  %v99 = vld [vmem:[%s98] sm:$0xff]
  %v100 = vld [vmem:[%s98 + $0x8] sm:$0xff]
  %v101 = vmul.f32 %v33, %v99
  %v102 = vmul.f32 %v33, %v100
  %v103 = vadd.f32 %v96, %v101
  %v104 = vadd.f32 %v97, %v102
  %v105 = vadd.f32 %v103, %v39
  %v106 = vadd.f32 %v104, %v39
  %v107 = vmul.f32 %v105, %v41
  %v108 = vmul.f32 %v106, %v42
  %v109 = vadd.f32 %v107, %v108
  %v110 = vrot.slane %v109, 4
  %v111 = vadd.f32 %v109, %v110
  %v112 = vrot.slane %v111, 2
  %v113 = vadd.f32 %v111, %v112
  %v114 = vrot.slane %v113, 1
  %v115 = vadd.f32 %v113, %v114
  %vm116 = vcmask 1040384
  %v117 = vsel %vm116, %v78, %v115
  %v118 = vmax.f32 %v117, 0.0
  %119 = vst [vmem:[%s4] sm:$0x3] %v118
  // Predicated region
  $region18: #{_hgnn_forward_jit.1} parent=0 // pred_check
    _
  $region19: #{_hgnn_forward_jit.1} parent=0 // pred_check_branch
    %121 = sbr.rel (0) target = $region21
  $region20: #{_hgnn_forward_jit.1} parent=0 // pred_region
    _
  $region21: #{_hgnn_forward_jit.1} parent=0 // pred_fallthru
    _
  // Predicated region
  $region22: #{_hgnn_forward_jit.1} parent=0 // pred_check
    _
  $region23: #{_hgnn_forward_jit.1} parent=0 // pred_check_branch
    %123 = sbr.rel (0) target = $region25
  $region24: #{_hgnn_forward_jit.1} parent=0 // pred_region
    _
  $region25: #{_hgnn_forward_jit.1} parent=0 // pred_fallthru
    _

</llo_original>
